<compile_context>
chip_gen: v7x
topology: tpu7x:2x2x1
jax: 0.10.0
libtpu: 0.0.40
codegen_flags: <defaults>
</compile_context>

<pallas_src>
import math

import jax
import jax.numpy as jnp
from jax.experimental import pallas as pl
from jax.experimental.pallas import tpu as pltpu


def _round_up(x, n):
    return ((x + n - 1) // n) * n


def _linear_kernel(x_ref, w_ref, b_ref, o_ref):
    # x_ref: (tm, n_in_f), w_ref: (n_in_f, n_out_f), b_ref: (1, n_out_f) f32
    acc = jnp.dot(x_ref[...], w_ref[...], preferred_element_type=jnp.float32)
    o_ref[...] = (acc + b_ref[...]).astype(o_ref.dtype)


def _default_fold(n_signal, n_embd):
    """Rows folded per vreg row so the feature axes become lane-dense (128)."""
    if n_signal >= 128 or n_signal <= 0 or 128 % n_signal != 0:
        return 1
    f = 128 // n_signal
    if (f * n_embd) % 128 != 0:
        return 1
    return f


class SignalEncoderPallas:
    """Pallas TPU forward for nn.Linear(n_signal, n_embd) on (..., n_signal)."""

    def __init__(self, weight, bias, *, fold=None):
        # weight: (n_embd, n_signal)  [PyTorch layout], bias: (n_embd,)
        self.n_embd, self.n_signal = weight.shape
        if fold is None:
            fold = _default_fold(self.n_signal, self.n_embd)
        self.fold = max(1, int(fold))

        wt = jnp.asarray(weight).T                       # (n_signal, n_embd)
        b = jnp.asarray(bias)
        if self.fold > 1:
            # Block-diagonal weight: fold copies of W^T -> (f*n_signal, f*n_embd).
            wt = jnp.kron(jnp.eye(self.fold, dtype=wt.dtype), wt)
            b = jnp.tile(b, self.fold)
        # Hoisted once at setup time (per review): no per-call transpose/kron.
        self.w_folded = wt
        self.b_folded = b.reshape(1, -1).astype(jnp.float32)

    def __call__(self, x, *, tm=None, out_dtype=None):
        n_signal, n_embd = self.n_signal, self.n_embd
        orig_shape = x.shape
        out_dtype = x.dtype if out_dtype is None else out_dtype
        m = math.prod(orig_shape[:-1]) if len(orig_shape) > 1 else 1

        fold = self.fold
        if fold > 1 and m % fold != 0:
            # TODO(synk): pad only the tail rows (<= fold-1) instead of dropping
            # the lane-dense folding when B*T is not a multiple of fold.
            fold = 1
        if fold > 1:
            w, b = self.w_folded, self.b_folded
        else:
            w = self.w_folded[:n_signal, :n_embd]
            b = self.b_folded[:, :n_embd]

        n_in_f = fold * n_signal
        n_out_f = fold * n_embd
        m_folded = m // fold

        # Free (contiguous, same HBM bytes): fold rows into the lane axis.
        x2d = x.reshape(m_folded, n_in_f)
        if w.dtype != x2d.dtype:
            w = w.astype(x2d.dtype)          # tiny (<=128x128); keeps MXU happy

        bytes_in = jnp.dtype(x2d.dtype).itemsize
        bytes_out = jnp.dtype(out_dtype).itemsize

        # ---- row-tile selection ------------------------------------------
        per_row = 2 * (n_in_f * bytes_in + n_out_f * bytes_out)  # double-buffered
        vmem_tile_budget = 40 * 1024 * 1024
        tm_cap = max(8, (vmem_tile_budget // max(per_row, 1)) // 8 * 8)

        if tm is None:
            if m_folded <= 64:
                # Tiny problem: one block, whole thing VMEM-resident, zero grid overhead.
                tm = m_folded
            else:
                # Large tiles amortize the ~0.35us/step overhead; aim for ~8 steps,
                # never below 256 rows/tile, and always >= 2 steps (v7x megacore).
                tm = min(8192, tm_cap,
                         max(256, _round_up(pl.cdiv(m_folded, 8), 8)))
                tm = min(tm, _round_up(pl.cdiv(m_folded, 2), 8))
        else:
            tm = int(tm)
            tm = m_folded if tm >= m_folded else max(8, (tm // 8) * 8)

        grid_m = pl.cdiv(m_folded, tm)

        # Explicit VMEM limit: enough for the double-buffered tiles + resident
        # weight/bias, capped at 48 MiB (v7x has only 64 MiB physical VMEM).
        required = (2 * tm * (n_in_f * bytes_in + n_out_f * bytes_out)
                    + 2 * n_in_f * n_out_f * bytes_in
                    + 2 * n_out_f * 4)
        vmem_limit = int(min(48 * 1024 * 1024,
                             max(2 * required, 16 * 1024 * 1024)))

        out = pl.pallas_call(
            _linear_kernel,
            out_shape=jax.ShapeDtypeStruct((m_folded, n_out_f), out_dtype),
            grid_spec=pltpu.PrefetchScalarGridSpec(
                num_scalar_prefetch=0,
                grid=(grid_m,),
                in_specs=[
                    pl.BlockSpec((tm, n_in_f), lambda i: (i, 0)),
                    # Constant index_maps -> weight/bias stay VMEM-resident.
                    pl.BlockSpec((n_in_f, n_out_f), lambda i: (0, 0)),
                    pl.BlockSpec((1, n_out_f), lambda i: (0, 0)),
                ],
                out_specs=pl.BlockSpec((tm, n_out_f), lambda i: (i, 0)),
            ),
            compiler_params=pltpu.CompilerParams(
                # Lets v7x shard the M axis over its 2 TensorCores when grid_m >= 2;
                # harmless on v5e/v6e.
                dimension_semantics=("parallel",),
                vmem_limit_bytes=vmem_limit,
            ),
        )(x2d, w, b)

        # Unfold: (m_folded, fold*n_embd) is exactly (M, n_embd) row-major.
        return out.reshape(*orig_shape[:-1], n_embd)


def reference_forward(x, weight, bias):
    return jnp.einsum("...s,es->...e", x, weight) + bias


if __name__ == "__main__":
    # Shapes consistent with the module: batch=2, seq=8, n_signal=32, n_embd=32
    B, T, n_signal, n_embd = 2, 8, 32, 32

    key = jax.random.PRNGKey(0)
    kx, kw, kb = jax.random.split(key, 3)

    x = jax.random.normal(kx, (B, T, n_signal), dtype=jnp.float32)
    # nn.Linear-style uniform(-1/sqrt(fan_in), 1/sqrt(fan_in)) init
    bound = 1.0 / (n_signal ** 0.5)
    weight = jax.random.uniform(kw, (n_embd, n_signal), jnp.float32, -bound, bound)
    bias = jax.random.uniform(kb, (n_embd,), jnp.float32, -bound, bound)

    # Parameters are folded (block-diagonal weight, tiled bias) once, up front.
    encoder = SignalEncoderPallas(weight, bias)

    # f32 path, tiny M -> single lane-dense block.
    y = encoder(x)
    y = jax.block_until_ready(y)
    y_ref = reference_forward(x, weight, bias)
    assert y.shape == (B, T, n_embd)
    assert jnp.allclose(y, y_ref, atol=1e-5, rtol=1e-5), "mismatch vs reference (f32)"

    # Larger M with a ragged grid tail (boundary-block handling, no jnp.pad),
    # multiple grid steps, and a narrowed bf16 output to halve write traffic.
    Mb, Tb = 4, 777  # M = 3108 folded rows -> 777 lane-dense rows, grid of 4 tiles
    xb = jax.random.normal(jax.random.PRNGKey(1), (Mb, Tb, n_signal), dtype=jnp.float32)
    yb = encoder(xb)
    yb = jax.block_until_ready(yb)
    yb_ref = reference_forward(xb, weight, bias)
    assert yb.shape == (Mb, Tb, n_embd)
    assert jnp.allclose(yb, yb_ref, atol=1e-5, rtol=1e-5), "mismatch vs reference (large M)"

    yb16 = encoder(xb, out_dtype=jnp.bfloat16)
    yb16 = jax.block_until_ready(yb16)
    assert yb16.dtype == jnp.bfloat16
    assert jnp.allclose(yb16.astype(jnp.float32), yb_ref, atol=5e-2, rtol=5e-2), \
        "mismatch vs reference (bf16 output)"

    print("KERNEL_OK")
</pallas_src>

<mosaic_0001>
module attributes {stable_mosaic.version = 11 : i64} {
  func.func @_linear_kernel(%arg0: i32, %arg1: memref<4x128xf32, #tpu.memory_space<vmem>>, %arg2: memref<128x128xf32, #tpu.memory_space<vmem>>, %arg3: memref<1x128xf32, #tpu.memory_space<vmem>>, %arg4: memref<4x128xf32, #tpu.memory_space<vmem>>) attributes {dimension_semantics = [#tpu.dimension_semantics<parallel>], iteration_bounds = array<i64: 1>, scalar_prefetch = 0 : i64, scratch_operands = 0 : i64, tpu.core_type = #tpu.core_type<tc>, window_params = [{transform_indices = @transform_0, window_bounds = array<i64: 4, 128>}, {pipeline_mode = #tpu.pipeline_mode<synchronous>, transform_indices = @transform_1, window_bounds = array<i64: 128, 128>}, {pipeline_mode = #tpu.pipeline_mode<synchronous>, transform_indices = @transform_2, window_bounds = array<i64: 1, 128>}, {transform_indices = @transform_3, window_bounds = array<i64: 4, 128>}]} {
    %c0 = arith.constant 0 : index
    %c0_0 = arith.constant 0 : index
    %0 = vector.load %arg1[%c0, %c0_0] : memref<4x128xf32, #tpu.memory_space<vmem>>, vector<4x128xf32>
    %c0_1 = arith.constant 0 : index
    %c0_2 = arith.constant 0 : index
    %1 = vector.load %arg2[%c0_1, %c0_2] : memref<128x128xf32, #tpu.memory_space<vmem>>, vector<128x128xf32>
    %cst = arith.constant dense<0.000000e+00> : vector<4x128xf32>
    %2 = tpu.matmul %0, %1, %cst {dimension_numbers = #tpu.dot_dimension_numbers<[1], [0], [0], [1], [0, 0, 1, 1], [], []>} : vector<4x128xf32>, vector<128x128xf32>, vector<4x128xf32> -> vector<4x128xf32>
    %c0_3 = arith.constant 0 : index
    %c0_4 = arith.constant 0 : index
    %3 = vector.load %arg3[%c0_3, %c0_4] : memref<1x128xf32, #tpu.memory_space<vmem>>, vector<1x128xf32>
    %4 = vector.broadcast %3 : vector<1x128xf32> to vector<4x128xf32>
    %5 = arith.addf %2, %4 : vector<4x128xf32>
    %c0_5 = arith.constant 0 : index
    %c0_6 = arith.constant 0 : index
    %6 = vector.load %arg4[%c0_5, %c0_6] : memref<4x128xf32, #tpu.memory_space<vmem>>, vector<4x128xf32>
    tpu.vector_store %arg4[%c0_5, %c0_6], %5 {strides = array<i32>} : memref<4x128xf32, #tpu.memory_space<vmem>>, vector<4x128xf32>,
    return
  }
  func.func @transform_0(%arg0: i32) -> (i32, i32) {
    %c0_i32 = arith.constant 0 : i32
    %c0_i32_0 = arith.constant 0 : i32
    return %arg0, %c0_i32 : i32, i32
  }
  func.func @transform_1(%arg0: i32) -> (i32, i32) {
    %c0_i32 = arith.constant 0 : i32
    %c0_i32_0 = arith.constant 0 : i32
    %c0_i32_1 = arith.constant 0 : i32
    return %c0_i32, %c0_i32_0 : i32, i32
  }
  func.func @transform_2(%arg0: i32) -> (i32, i32) {
    %c0_i32 = arith.constant 0 : i32
    %c0_i32_0 = arith.constant 0 : i32
    %c0_i32_1 = arith.constant 0 : i32
    return %c0_i32, %c0_i32_0 : i32, i32
  }
  func.func @transform_3(%arg0: i32) -> (i32, i32) {
    %c0_i32 = arith.constant 0 : i32
    %c0_i32_0 = arith.constant 0 : i32
    return %arg0, %c0_i32 : i32, i32
  }
}

</mosaic_0001>

<llo_original>
// kernel: tpu_custom_call.1
$region0: #{tpu_custom_call.1}
  #allocation0 [shape = 'u32[]', space=smem, size = 0x4, offset = 0x4, fixed_abs, tag = 'smem constant byte address 0x4 - core index']
  #allocation1 [shape = 'u32[144,128]{1,0:T(1,128)}', space=vmem, size = 0x12000, scoped, tag = 'internal scratch']
  %s0 = inlined_call_operand.hbm [shape: f32[4,128], index: 0, kind: input, shape index: {}]
  %s1 = inlined_call_operand.hbm [shape: f32[128,128], index: 1, kind: input, shape index: {}]
  %s2 = inlined_call_operand.vmem [shape: f32[1,128], index: 2, kind: input, shape index: {}]
  %s3 = inlined_call_operand.hbm [shape: f32[4,128], index: 3, kind: output, shape index: {}]
  %s4 = sld [smem:[#allocation0]]
  $region30: #{tpu_custom_call.1} parent=0
    _
  %s6 = ssub.s32 1, %s4
  %s7 = scalar_select 0, %s6, %s4
  $region1: #{tpu_custom_call.1} parent=0
    #allocation2 [shape = 'u8[2048]{0}', space=vmem, size = 0x800, scoped, tag = 'input window, operand 0, single buffered']
    #allocation3 [shape = 's32[1]{0}', space=sflag, size = 0x4, scoped, tag = 'scoped memory for tpu_custom_call.1']
    #allocation4 [shape = 's32[1]{0}', space=sflag, size = 0x4, scoped, tag = 'scoped memory for tpu_custom_call.1']
    #allocation5 [shape = 'u8[65536]{0}', space=vmem, size = 0x10000, scoped, tag = 'input window, operand 1, single buffered']
    #allocation6 [shape = 's32[1]{0}', space=sflag, size = 0x4, scoped, tag = 'scoped memory for tpu_custom_call.1']
    #allocation7 [shape = 'u8[2048]{0}', space=vmem, size = 0x800, scoped, tag = 'output window, operand 0, single buffered']
    %8 = vsyncpa [#allocation3], 0
    %9 = vsyncpa [#allocation6], 0
    %10 = vsyncpa [#allocation4], 0
    // Predicated region
    $region2: #{tpu_custom_call.1} parent=1 // pred_check
      _
    $region3: #{tpu_custom_call.1} parent=1 // pred_check_branch
      %12 = sbr.rel (0) target = $region5
    $region4: #{tpu_custom_call.1} parent=1 // pred_region
      %s14 = ssub.s32 64, 64
      %15 = vsyncadd [#allocation3], %s14
      %s17 = sshll.u32 [#allocation2], 4
      %s18 = int_to_ptr.vmem [resolvable:$true] %s17
      %20 = dma.hbm_to_vmem [thread:$0]  %s0, 64, %s18, [#allocation3]
    $region5: #{tpu_custom_call.1} parent=1 // pred_fallthru
      _
    // Predicated region
    $region6: #{tpu_custom_call.1} parent=1 // pred_check
      _
    $region7: #{tpu_custom_call.1} parent=1 // pred_check_branch
      %22 = sbr.rel (0) target = $region9
    $region8: #{tpu_custom_call.1} parent=1 // pred_region
      %s24 = ssub.s32 2048, 2048
      %25 = vsyncadd [#allocation6], %s24
      %s26 = sshll.u32 [#allocation5], 4
      %s27 = int_to_ptr.vmem [resolvable:$true] %s26
      %32 = dma.hbm_to_vmem [thread:$0]  %s1, 2048, %s27, [#allocation6], 128, 128, 8
    $region9: #{tpu_custom_call.1} parent=1 // pred_fallthru
      _
    // Predicated region
    $region10: #{tpu_custom_call.1} parent=1 // pred_check
      _
    $region11: #{tpu_custom_call.1} parent=1 // pred_check_branch
      %34 = sbr.rel (0) target = $region13
    $region12: #{tpu_custom_call.1} parent=1 // pred_region
      _
    $region13: #{tpu_custom_call.1} parent=1 // pred_fallthru
      _
    // Predicated region
    $region14: #{tpu_custom_call.1} parent=1 // pred_check
      _
    $region15: #{tpu_custom_call.1} parent=1 // pred_check_branch
      %36 = sbr.rel (0) target = $region17
    $region16: #{tpu_custom_call.1} parent=1 // pred_region
      %37 = dma.done [#allocation3], 64
    $region17: #{tpu_custom_call.1} parent=1 // pred_fallthru
      _
    // Predicated region
    $region18: #{tpu_custom_call.1} parent=1 // pred_check
      _
    $region19: #{tpu_custom_call.1} parent=1 // pred_check_branch
      %39 = sbr.rel (0) target = $region21
    $region20: #{tpu_custom_call.1} parent=1 // pred_region
      %40 = dma.done [#allocation6], 2048
    $region21: #{tpu_custom_call.1} parent=1 // pred_fallthru
      _
    %v41 = vld [vmem:[#allocation2] sm:$0xf]
    %v42 = vld [vmem:[#allocation5] sm:$0xff]
    %v43 = vld [vmem:[#allocation5 + $0x8] sm:$0xff]
    %v44 = vld [vmem:[#allocation5 + $0x10] sm:$0xff]
    %v45 = vld [vmem:[#allocation5 + $0x18] sm:$0xff]
    %v46 = vld [vmem:[#allocation5 + $0x20] sm:$0xff]
    %v47 = vld [vmem:[#allocation5 + $0x28] sm:$0xff]
    %v48 = vld [vmem:[#allocation5 + $0x30] sm:$0xff]
    %v49 = vld [vmem:[#allocation5 + $0x38] sm:$0xff]
    %v50 = vld [vmem:[#allocation5 + $0x40] sm:$0xff]
    %v51 = vld [vmem:[#allocation5 + $0x48] sm:$0xff]
    %v52 = vld [vmem:[#allocation5 + $0x50] sm:$0xff]
    %v53 = vld [vmem:[#allocation5 + $0x58] sm:$0xff]
    %v54 = vld [vmem:[#allocation5 + $0x60] sm:$0xff]
    %v55 = vld [vmem:[#allocation5 + $0x68] sm:$0xff]
    %v56 = vld [vmem:[#allocation5 + $0x70] sm:$0xff]
    %v57 = vld [vmem:[#allocation5 + $0x78] sm:$0xff]
    %v58 = vld [vmem:[%s2] sm:$0x1]
    %v60 = vlaneseq
    %v61 = vshrl.u32 %v60, 7
    %v62 = vsub.s32 0, %v61
    %v63 = vrot.slane %v58, %v62
    %65 = vmatprep.subr.mxu0 0.0
    %66 = vmatpush1.msra.mxu0 %v42
    %67 = vmatprep.subr.mxu0 0.0
    %68 = vmatpush1.msra.mxu0 %v43
    %69 = vmatprep.subr.mxu0 0.0
    %70 = vmatpush1.msra.mxu0 %v44
    %71 = vmatprep.subr.mxu0 0.0
    %72 = vmatpush1.msra.mxu0 %v45
    %73 = vmatprep.subr.mxu0 0.0
    %74 = vmatpush1.msra.mxu0 %v46
    %75 = vmatprep.subr.mxu0 0.0
    %76 = vmatpush1.msra.mxu0 %v47
    %77 = vmatprep.subr.mxu0 0.0
    %78 = vmatpush1.msra.mxu0 %v48
    %79 = vmatprep.subr.mxu0 0.0
    %80 = vmatpush1.msra.mxu0 %v49
    %81 = vmatprep.subr.mxu0 0.0
    %82 = vmatpush1.msra.mxu0 %v50
    %83 = vmatprep.subr.mxu0 0.0
    %84 = vmatpush1.msra.mxu0 %v51
    %85 = vmatprep.subr.mxu0 0.0
    %86 = vmatpush1.msra.mxu0 %v52
    %87 = vmatprep.subr.mxu0 0.0
    %88 = vmatpush1.msra.mxu0 %v53
    %89 = vmatprep.subr.mxu0 0.0
    %90 = vmatpush1.msra.mxu0 %v54
    %91 = vmatprep.subr.mxu0 0.0
    %92 = vmatpush1.msra.mxu0 %v55
    %93 = vmatprep.subr.mxu0 0.0
    %94 = vmatpush1.msra.mxu0 %v56
    %95 = vmatprep.subr.mxu0 0.0
    %96 = vmatpush1.msra.mxu0 %v57
    %97 = vmatprep.subr.mxu0 0.0
    %98 = vmatpush1.msra.mxu0 0.0
    %99 = vmatprep.subr.mxu0 0.0
    %100 = vmatpush1.msra.mxu0 0.0
    %101 = vmatprep.subr.mxu0 0.0
    %102 = vmatpush1.msra.mxu0 0.0
    %103 = vmatprep.subr.mxu0 0.0
    %104 = vmatpush1.msra.mxu0 0.0
    %105 = vmatprep.subr.mxu0 0.0
    %106 = vmatpush1.msra.mxu0 0.0
    %107 = vmatprep.subr.mxu0 0.0
    %108 = vmatpush1.msra.mxu0 0.0
    %109 = vmatprep.subr.mxu0 0.0
    %110 = vmatpush1.msra.mxu0 0.0
    %111 = vmatprep.subr.mxu0 0.0
    %112 = vmatpush1.msra.mxu0 0.0
    %113 = vmatprep.subr.mxu0 0.0
    %114 = vmatpush1.msra.mxu0 0.0
    %115 = vmatprep.subr.mxu0 0.0
    %116 = vmatpush1.msra.mxu0 0.0
    %117 = vmatprep.subr.mxu0 0.0
    %118 = vmatpush1.msra.mxu0 0.0
    %119 = vmatprep.subr.mxu0 0.0
    %120 = vmatpush1.msra.mxu0 0.0
    %121 = vmatprep.subr.mxu0 0.0
    %122 = vmatpush1.msra.mxu0 0.0
    %123 = vmatprep.subr.mxu0 0.0
    %124 = vmatpush1.msra.mxu0 0.0
    %125 = vmatprep.subr.mxu0 0.0
    %126 = vmatpush1.msra.mxu0 0.0
    %127 = vmatprep.subr.mxu0 0.0
    %128 = vmatpush1.msra.mxu0 0.0
    %129 = vmatprep.mubr.f32.mxu0 0.0
    %130 = vmatmul.mubr.f32.gmra.mrb[0].mxu0 %v41
    %v131 = vpop.f32.mrb[0].mxu0
    %v132 = vadd.f32 %v63, %v131
    %v133 = vpop.f32.mrb[0].mxu0
    %134 = vdwg.mxu0
    %135 = vst [vmem:[#allocation7] sm:$0xf] %v132
    // Predicated region
    $region22: #{tpu_custom_call.1} parent=1 // pred_check
      _
    $region23: #{tpu_custom_call.1} parent=1 // pred_check_branch
      %137 = sbr.rel (0) target = $region25
    $region24: #{tpu_custom_call.1} parent=1 // pred_region
      %s139 = ssub.s32 64, 64
      %140 = vsyncadd [#allocation4], %s139
      %s142 = sshll.u32 [#allocation7], 4
      %s143 = int_to_ptr.vmem [resolvable:$true] %s142
      %145 = dma.vmem_to_hbm [thread:$0]  %s143, 64, %s3, [#allocation4]
    $region25: #{tpu_custom_call.1} parent=1 // pred_fallthru
      _
    // Predicated region
    $region26: #{tpu_custom_call.1} parent=1 // pred_check
      _
    $region27: #{tpu_custom_call.1} parent=1 // pred_check_branch
      %147 = sbr.rel (0) target = $region29
    $region28: #{tpu_custom_call.1} parent=1 // pred_region
      %148 = dma.done [#allocation4], 64
    $region29: #{tpu_custom_call.1} parent=1 // pred_fallthru
      _
    %149 = vsyncpa [#allocation3], 1
    %150 = vsyncpa [#allocation6], 1
    %151 = vsyncpa [#allocation4], 1

</llo_original>
